<compile_context>
chip_gen: v7x
topology: tpu7x:2x2x1
jax: 0.10.0
libtpu: 0.0.40
codegen_flags: <defaults>
</compile_context>

<pallas_src>
import jax
import jax.numpy as jnp
from jax.experimental import pallas as pl
from jax.experimental.pallas import tpu as pltpu

# net_utils.activation_func('leaky_relu') -> LeakyReLU(negative_slope=0.20)
NEG_SLOPE = 0.20
LANE = 128


def _round_up(n, m):
    return ((n + m - 1) // m) * m


def _leaky_relu(x):
    return jnp.where(x > 0, x, NEG_SLOPE * x)


# ----------------------------------------------------------------------------
# Parameter packing: dense bf16 weight slab + small f32 bias slab.
# Each layer's padded (din_pad, dout_pad) weight is split into dout_pad/128
# column chunks of shape (din_pad, 128) that are row-stacked, so the slab only
# holds real lane-padded weights (no max-cols padding).  Zero padding is
# exact: padded weight rows/cols are 0, padded bias entries are 0, and
# leaky_relu(0) == 0, so padded activation columns stay 0 through all layers.
# ----------------------------------------------------------------------------
def pack_params(params, weight_dtype=jnp.bfloat16):
    dims = [params[0][0].shape[0]] + [w.shape[1] for w, _ in params]
    pad = [_round_up(d, LANE) for d in dims]

    chunk_off, off = [], 0
    for i in range(len(params)):
        din, dout = pad[i], pad[i + 1]
        offs = []
        for _ in range(dout // LANE):
            offs.append(off)
            off += din
        chunk_off.append(tuple(offs))
    total_rows = off
    max_out = max(pad[1:])

    w_slab = jnp.zeros((total_rows, LANE), weight_dtype)
    b_slab = jnp.zeros((_round_up(len(params), 8), max_out), jnp.float32)
    for i, (w, b) in enumerate(params):
        wpad = jnp.zeros((pad[i], pad[i + 1]), weight_dtype)
        wpad = wpad.at[:w.shape[0], :w.shape[1]].set(w.astype(weight_dtype))
        for j, r0 in enumerate(chunk_off[i]):
            w_slab = w_slab.at[r0:r0 + pad[i], :].set(
                wpad[:, j * LANE:(j + 1) * LANE])
        b_flat = jnp.reshape(b, (-1,)).astype(jnp.float32)
        b_slab = b_slab.at[i, :b_flat.shape[0]].set(b_flat)

    meta = {"dims": tuple(dims), "pad": tuple(pad), "chunk_off": tuple(chunk_off)}
    return w_slab, b_slab, meta


# ----------------------------------------------------------------------------
# Kernel: fused 6-layer MLP on one (TB, 128) batch tile.
# Per layer: one MXU pass per 128-wide output chunk (static, tile-aligned
# slices of the dense weight slab), lane-concat, f32 bias + LeakyReLU, recast
# to bf16 for the next layer.  Only the real latent columns are stored.
# ----------------------------------------------------------------------------
def _make_kernel(pad, chunk_off, latent):
    n_layers = len(chunk_off)

    def kernel(x_ref, w_ref, b_ref, out_ref):
        h = x_ref[...]                                      # bf16 (TB, pad[0])
        for i in range(n_layers):
            din, dout = pad[i], pad[i + 1]
            cols = []
            for r0 in chunk_off[i]:
                w = w_ref[r0:r0 + din, :]                   # bf16 (din,128), static
                cols.append(jnp.dot(h, w, preferred_element_type=jnp.float32))
            z = cols[0] if len(cols) == 1 else jnp.concatenate(cols, axis=-1)
            z = z + b_ref[i:i + 1, :dout]                   # f32 bias broadcast
            z = _leaky_relu(z)                              # f32 VPU (v5e-safe)
            # Intermediate activations go back to bf16 for the next MXU pass;
            # the final layer stays in f32.
            h = z.astype(jnp.bfloat16) if i < n_layers - 1 else z
        # Store only the real latent columns (no zero-padding writeback).
        out_ref[...] = h[:, :latent].astype(out_ref.dtype)

    return kernel


def _pick_batch_tile(batch, tb):
    tb_eff = min(tb, _round_up(batch, 8))
    # v7x has 2 TensorCores: once there is enough work, keep >= 2 'parallel'
    # grid steps so both cores are used.
    if batch >= 2 * 128:
        tb_eff = min(tb_eff, _round_up(pl.cdiv(batch, 2), 8))
    return max(tb_eff, 8)


def fully_connected_encoder(x, w_slab, b_slab, meta, tb=512):
    """x: [B, input_channels] f32; returns [B, latent_size] f32."""
    dims, pad, chunk_off = meta["dims"], meta["pad"], meta["chunk_off"]
    in_dim, latent = dims[0], dims[-1]
    in_pad = pad[0]

    B = x.shape[0]
    tb_eff = _pick_batch_tile(B, tb)
    grid = (pl.cdiv(B, tb_eff),)

    # Pad only the feature axis (e.g. 3 -> 128) with zeros and cast to bf16.
    # The batch remainder is handled by the ragged last grid block; its rows
    # never reach HBM because output writes are clipped to B.
    xp = jnp.pad(x.astype(jnp.bfloat16), ((0, 0), (0, in_pad - in_dim)))

    kernel = _make_kernel(pad, chunk_off, latent)

    rows = grid[0] * tb_eff
    flops = 2 * rows * sum(pad[i] * pad[i + 1] for i in range(len(pad) - 1))
    bytes_accessed = (w_slab.size * w_slab.dtype.itemsize
                      + b_slab.size * b_slab.dtype.itemsize
                      + xp.size * xp.dtype.itemsize
                      + B * latent * 4)

    return pl.pallas_call(
        kernel,
        out_shape=jax.ShapeDtypeStruct((B, latent), jnp.float32),
        grid=grid,
        in_specs=[
            # Batch-tiled input: default double-buffering pipelines the DMA.
            pl.BlockSpec((tb_eff, in_pad), lambda i: (i, 0)),
            # Weights/biases: constant index_map -> resident in VMEM; single
            # buffer since they are never re-fetched across grid steps.
            pl.BlockSpec(w_slab.shape, lambda i: (0, 0),
                         pipeline_mode=pl.Buffered(1)),
            pl.BlockSpec(b_slab.shape, lambda i: (0, 0),
                         pipeline_mode=pl.Buffered(1)),
        ],
        out_specs=pl.BlockSpec((tb_eff, latent), lambda i: (i, 0)),
        compiler_params=pltpu.CompilerParams(
            dimension_semantics=("parallel",)),
        cost_estimate=pl.CostEstimate(
            flops=flops, transcendentals=0, bytes_accessed=bytes_accessed),
    )(xp, w_slab, b_slab)


# ----------------------------------------------------------------------------
# Synthetic kaiming_uniform-style init + reference.
# ----------------------------------------------------------------------------
def init_params(key, input_channels, n_neurons, latent_size):
    dims = [input_channels] + list(n_neurons) + [latent_size]
    params = []
    for i in range(len(dims) - 1):
        fan_in, fan_out = dims[i], dims[i + 1]
        key, wk, bk = jax.random.split(key, 3)
        bound = (6.0 / fan_in) ** 0.5
        w = jax.random.uniform(wk, (fan_in, fan_out), jnp.float32, -bound, bound)
        b_bound = 1.0 / (fan_in ** 0.5)
        b = jax.random.uniform(bk, (1, fan_out), jnp.float32, -b_bound, b_bound)
        params.append((w, b))
    return params


def reference_forward_bf16(x, params):
    """Same math as the kernel: bf16 operands, f32 accumulation, f32 output."""
    h = x.astype(jnp.bfloat16)
    z = None
    for w, b in params:
        z = jnp.dot(h, w.astype(jnp.bfloat16),
                    preferred_element_type=jnp.float32) + b
        z = _leaky_relu(z)
        h = z.astype(jnp.bfloat16)
    return z


if __name__ == "__main__":
    input_channels = 3
    n_neurons = [32, 64, 96, 128, 256]
    latent_size = 29 * 10

    key = jax.random.PRNGKey(0)
    params = init_params(key, input_channels, n_neurons, latent_size)
    w_slab, b_slab, meta = pack_params(params)

    # Small deterministic batch (single grid block).
    key, xk = jax.random.split(key)
    x_small = jax.random.normal(xk, (8, input_channels), jnp.float32)
    out_small = jax.block_until_ready(
        fully_connected_encoder(x_small, w_slab, b_slab, meta))
    ref_small = reference_forward_bf16(x_small, params)
    assert out_small.shape == (8, latent_size)
    assert jnp.allclose(out_small, ref_small, atol=1e-3, rtol=1e-3), \
        "mismatch vs JAX reference (small batch)"

    # Ragged batch: grid of 2 'parallel' blocks, last block partial.
    key, xk2 = jax.random.split(key)
    x_big = jax.random.normal(xk2, (300, input_channels), jnp.float32)
    out_big = jax.block_until_ready(
        fully_connected_encoder(x_big, w_slab, b_slab, meta))
    ref_big = reference_forward_bf16(x_big, params)
    assert out_big.shape == (300, latent_size)
    assert jnp.allclose(out_big, ref_big, atol=1e-3, rtol=1e-3), \
        "mismatch vs JAX reference (ragged batch)"

    print("KERNEL_OK")
</pallas_src>

<mosaic_0001>
module attributes {stable_mosaic.version = 11 : i64} {
  func.func @kernel(%arg0: i32, %arg1: memref<8x128xbf16, #tpu.memory_space<vmem>>, %arg2: memref<1536x128xbf16, #tpu.memory_space<vmem>>, %arg3: memref<8x384xf32, #tpu.memory_space<vmem>>, %arg4: memref<8x290xf32, #tpu.memory_space<vmem>>) attributes {dimension_semantics = [#tpu.dimension_semantics<parallel>], iteration_bounds = array<i64: 1>, scalar_prefetch = 0 : i64, scratch_operands = 0 : i64, tpu.core_type = #tpu.core_type<tc>, window_params = [{transform_indices = @transform_0, window_bounds = array<i64: 8, 128>}, {pipeline_mode = #tpu.pipeline_mode<synchronous>, transform_indices = @transform_1, window_bounds = array<i64: 1536, 128>}, {pipeline_mode = #tpu.pipeline_mode<synchronous>, transform_indices = @transform_2, window_bounds = array<i64: 8, 384>}, {transform_indices = @transform_3, window_bounds = array<i64: 8, 290>}]} {
    %c0 = arith.constant 0 : index
    %c0_0 = arith.constant 0 : index
    %0 = vector.load %arg1[%c0, %c0_0] : memref<8x128xbf16, #tpu.memory_space<vmem>>, vector<8x128xbf16>
    %c0_1 = arith.constant 0 : index
    %c0_2 = arith.constant 0 : index
    %1 = vector.load %arg2[%c0_1, %c0_2] : memref<1536x128xbf16, #tpu.memory_space<vmem>>, vector<128x128xbf16>
    %cst = arith.constant dense<0.000000e+00> : vector<8x128xf32>
    %2 = tpu.matmul %0, %1, %cst {dimension_numbers = #tpu.dot_dimension_numbers<[1], [0], [0], [1], [0, 0, 1, 1], [], []>} : vector<8x128xbf16>, vector<128x128xbf16>, vector<8x128xf32> -> vector<8x128xf32>
    %c0_3 = arith.constant 0 : index
    %c0_4 = arith.constant 0 : index
    %3 = vector.load %arg3[%c0_3, %c0_4] : memref<8x384xf32, #tpu.memory_space<vmem>>, vector<1x128xf32>
    %4 = vector.broadcast %3 : vector<1x128xf32> to vector<8x128xf32>
    %5 = arith.addf %2, %4 : vector<8x128xf32>
    %cst_5 = arith.constant 0.000000e+00 : f32
    %6 = vector.broadcast %cst_5 : f32 to vector<8x128xf32>
    %7 = arith.cmpf ogt, %5, %6 : vector<8x128xf32>
    %cst_6 = arith.constant 2.000000e-01 : f32
    %8 = vector.broadcast %cst_6 : f32 to vector<8x128xf32>
    %9 = arith.mulf %8, %5 : vector<8x128xf32>
    %10 = arith.select %7, %5, %9 : vector<8x128xi1>, vector<8x128xf32>
    %11 = arith.truncf %10 : vector<8x128xf32> to vector<8x128xbf16>
    %c128 = arith.constant 128 : index
    %c0_7 = arith.constant 0 : index
    %12 = vector.load %arg2[%c128, %c0_7] : memref<1536x128xbf16, #tpu.memory_space<vmem>>, vector<128x128xbf16>
    %cst_8 = arith.constant dense<0.000000e+00> : vector<8x128xf32>
    %13 = tpu.matmul %11, %12, %cst_8 {dimension_numbers = #tpu.dot_dimension_numbers<[1], [0], [0], [1], [0, 0, 1, 1], [], []>} : vector<8x128xbf16>, vector<128x128xbf16>, vector<8x128xf32> -> vector<8x128xf32>
    %c1 = arith.constant 1 : index
    %c0_9 = arith.constant 0 : index
    %14 = vector.load %arg3[%c1, %c0_9] : memref<8x384xf32, #tpu.memory_space<vmem>>, vector<1x128xf32>
    %15 = vector.broadcast %14 : vector<1x128xf32> to vector<8x128xf32>
    %16 = arith.addf %13, %15 : vector<8x128xf32>
    %cst_10 = arith.constant 0.000000e+00 : f32
    %17 = vector.broadcast %cst_10 : f32 to vector<8x128xf32>
    %18 = arith.cmpf ogt, %16, %17 : vector<8x128xf32>
    %cst_11 = arith.constant 2.000000e-01 : f32
    %19 = vector.broadcast %cst_11 : f32 to vector<8x128xf32>
    %20 = arith.mulf %19, %16 : vector<8x128xf32>
    %21 = arith.select %18, %16, %20 : vector<8x128xi1>, vector<8x128xf32>
    %22 = arith.truncf %21 : vector<8x128xf32> to vector<8x128xbf16>
    %c256 = arith.constant 256 : index
    %c0_12 = arith.constant 0 : index
    %23 = vector.load %arg2[%c256, %c0_12] : memref<1536x128xbf16, #tpu.memory_space<vmem>>, vector<128x128xbf16>
    %cst_13 = arith.constant dense<0.000000e+00> : vector<8x128xf32>
    %24 = tpu.matmul %22, %23, %cst_13 {dimension_numbers = #tpu.dot_dimension_numbers<[1], [0], [0], [1], [0, 0, 1, 1], [], []>} : vector<8x128xbf16>, vector<128x128xbf16>, vector<8x128xf32> -> vector<8x128xf32>
    %c2 = arith.constant 2 : index
    %c0_14 = arith.constant 0 : index
    %25 = vector.load %arg3[%c2, %c0_14] : memref<8x384xf32, #tpu.memory_space<vmem>>, vector<1x128xf32>
    %26 = vector.broadcast %25 : vector<1x128xf32> to vector<8x128xf32>
    %27 = arith.addf %24, %26 : vector<8x128xf32>
    %cst_15 = arith.constant 0.000000e+00 : f32
    %28 = vector.broadcast %cst_15 : f32 to vector<8x128xf32>
    %29 = arith.cmpf ogt, %27, %28 : vector<8x128xf32>
    %cst_16 = arith.constant 2.000000e-01 : f32
    %30 = vector.broadcast %cst_16 : f32 to vector<8x128xf32>
    %31 = arith.mulf %30, %27 : vector<8x128xf32>
    %32 = arith.select %29, %27, %31 : vector<8x128xi1>, vector<8x128xf32>
    %33 = arith.truncf %32 : vector<8x128xf32> to vector<8x128xbf16>
    %c384 = arith.constant 384 : index
    %c0_17 = arith.constant 0 : index
    %34 = vector.load %arg2[%c384, %c0_17] : memref<1536x128xbf16, #tpu.memory_space<vmem>>, vector<128x128xbf16>
    %cst_18 = arith.constant dense<0.000000e+00> : vector<8x128xf32>
    %35 = tpu.matmul %33, %34, %cst_18 {dimension_numbers = #tpu.dot_dimension_numbers<[1], [0], [0], [1], [0, 0, 1, 1], [], []>} : vector<8x128xbf16>, vector<128x128xbf16>, vector<8x128xf32> -> vector<8x128xf32>
    %c3 = arith.constant 3 : index
    %c0_19 = arith.constant 0 : index
    %36 = vector.load %arg3[%c3, %c0_19] : memref<8x384xf32, #tpu.memory_space<vmem>>, vector<1x128xf32>
    %37 = vector.broadcast %36 : vector<1x128xf32> to vector<8x128xf32>
    %38 = arith.addf %35, %37 : vector<8x128xf32>
    %cst_20 = arith.constant 0.000000e+00 : f32
    %39 = vector.broadcast %cst_20 : f32 to vector<8x128xf32>
    %40 = arith.cmpf ogt, %38, %39 : vector<8x128xf32>
    %cst_21 = arith.constant 2.000000e-01 : f32
    %41 = vector.broadcast %cst_21 : f32 to vector<8x128xf32>
    %42 = arith.mulf %41, %38 : vector<8x128xf32>
    %43 = arith.select %40, %38, %42 : vector<8x128xi1>, vector<8x128xf32>
    %44 = arith.truncf %43 : vector<8x128xf32> to vector<8x128xbf16>
    %c512 = arith.constant 512 : index
    %c0_22 = arith.constant 0 : index
    %45 = vector.load %arg2[%c512, %c0_22] : memref<1536x128xbf16, #tpu.memory_space<vmem>>, vector<128x128xbf16>
    %cst_23 = arith.constant dense<0.000000e+00> : vector<8x128xf32>
    %46 = tpu.matmul %44, %45, %cst_23 {dimension_numbers = #tpu.dot_dimension_numbers<[1], [0], [0], [1], [0, 0, 1, 1], [], []>} : vector<8x128xbf16>, vector<128x128xbf16>, vector<8x128xf32> -> vector<8x128xf32>
    %c640 = arith.constant 640 : index
    %c0_24 = arith.constant 0 : index
    %47 = vector.load %arg2[%c640, %c0_24] : memref<1536x128xbf16, #tpu.memory_space<vmem>>, vector<128x128xbf16>
    %cst_25 = arith.constant dense<0.000000e+00> : vector<8x128xf32>
    %48 = tpu.matmul %44, %47, %cst_25 {dimension_numbers = #tpu.dot_dimension_numbers<[1], [0], [0], [1], [0, 0, 1, 1], [], []>} : vector<8x128xbf16>, vector<128x128xbf16>, vector<8x128xf32> -> vector<8x128xf32>
    %49 = tpu.concatenate %46, %48 in 1 : vector<8x128xf32>, vector<8x128xf32> -> vector<8x256xf32>
    %c4 = arith.constant 4 : index
    %c0_26 = arith.constant 0 : index
    %50 = vector.load %arg3[%c4, %c0_26] : memref<8x384xf32, #tpu.memory_space<vmem>>, vector<1x256xf32>
    %51 = vector.broadcast %50 : vector<1x256xf32> to vector<8x256xf32>
    %52 = arith.addf %49, %51 : vector<8x256xf32>
    %cst_27 = arith.constant 0.000000e+00 : f32
    %53 = vector.broadcast %cst_27 : f32 to vector<8x256xf32>
    %54 = arith.cmpf ogt, %52, %53 : vector<8x256xf32>
    %cst_28 = arith.constant 2.000000e-01 : f32
    %55 = vector.broadcast %cst_28 : f32 to vector<8x256xf32>
    %56 = arith.mulf %55, %52 : vector<8x256xf32>
    %57 = arith.select %54, %52, %56 : vector<8x256xi1>, vector<8x256xf32>
    %58 = arith.truncf %57 : vector<8x256xf32> to vector<8x256xbf16>
    %c768 = arith.constant 768 : index
    %c0_29 = arith.constant 0 : index
    %59 = vector.load %arg2[%c768, %c0_29] : memref<1536x128xbf16, #tpu.memory_space<vmem>>, vector<256x128xbf16>
    %cst_30 = arith.constant dense<0.000000e+00> : vector<8x128xf32>
    %60 = tpu.matmul %58, %59, %cst_30 {dimension_numbers = #tpu.dot_dimension_numbers<[1], [0], [0], [1], [0, 0, 1, 1], [], []>} : vector<8x256xbf16>, vector<256x128xbf16>, vector<8x128xf32> -> vector<8x128xf32>
    %c1024 = arith.constant 1024 : index
    %c0_31 = arith.constant 0 : index
    %61 = vector.load %arg2[%c1024, %c0_31] : memref<1536x128xbf16, #tpu.memory_space<vmem>>, vector<256x128xbf16>
    %cst_32 = arith.constant dense<0.000000e+00> : vector<8x128xf32>
    %62 = tpu.matmul %58, %61, %cst_32 {dimension_numbers = #tpu.dot_dimension_numbers<[1], [0], [0], [1], [0, 0, 1, 1], [], []>} : vector<8x256xbf16>, vector<256x128xbf16>, vector<8x128xf32> -> vector<8x128xf32>
    %c1280 = arith.constant 1280 : index
    %c0_33 = arith.constant 0 : index
    %63 = vector.load %arg2[%c1280, %c0_33] : memref<1536x128xbf16, #tpu.memory_space<vmem>>, vector<256x128xbf16>
    %cst_34 = arith.constant dense<0.000000e+00> : vector<8x128xf32>
    %64 = tpu.matmul %58, %63, %cst_34 {dimension_numbers = #tpu.dot_dimension_numbers<[1], [0], [0], [1], [0, 0, 1, 1], [], []>} : vector<8x256xbf16>, vector<256x128xbf16>, vector<8x128xf32> -> vector<8x128xf32>
    %65 = tpu.concatenate %60, %62, %64 in 1 : vector<8x128xf32>, vector<8x128xf32>, vector<8x128xf32> -> vector<8x384xf32>
    %c5 = arith.constant 5 : index
    %c0_35 = arith.constant 0 : index
    %66 = vector.load %arg3[%c5, %c0_35] : memref<8x384xf32, #tpu.memory_space<vmem>>, vector<1x384xf32>
    %67 = vector.broadcast %66 : vector<1x384xf32> to vector<8x384xf32>
    %68 = arith.addf %65, %67 : vector<8x384xf32>
    %cst_36 = arith.constant 0.000000e+00 : f32
    %69 = vector.broadcast %cst_36 : f32 to vector<8x384xf32>
    %70 = arith.cmpf ogt, %68, %69 : vector<8x384xf32>
    %cst_37 = arith.constant 2.000000e-01 : f32
    %71 = vector.broadcast %cst_37 : f32 to vector<8x384xf32>
    %72 = arith.mulf %71, %68 : vector<8x384xf32>
    %73 = arith.select %70, %68, %72 : vector<8x384xi1>, vector<8x384xf32>
    %74 = vector.extract_strided_slice %73 {offsets = [0, 0], sizes = [8, 290], strides = [1, 1]} : vector<8x384xf32> to vector<8x290xf32>
    %c0_38 = arith.constant 0 : index
    %c0_39 = arith.constant 0 : index
    %75 = vector.load %arg4[%c0_38, %c0_39] : memref<8x290xf32, #tpu.memory_space<vmem>>, vector<8x290xf32>
    tpu.vector_store %arg4[%c0_38, %c0_39], %74 {strides = array<i32>} : memref<8x290xf32, #tpu.memory_space<vmem>>, vector<8x290xf32>,
    return
  }
  func.func @transform_0(%arg0: i32) -> (i32, i32) {
    %c0_i32 = arith.constant 0 : i32
    %c0_i32_0 = arith.constant 0 : i32
    return %arg0, %c0_i32 : i32, i32
  }
  func.func @transform_1(%arg0: i32) -> (i32, i32) {
    %c0_i32 = arith.constant 0 : i32
    %c0_i32_0 = arith.constant 0 : i32
    %c0_i32_1 = arith.constant 0 : i32
    return %c0_i32, %c0_i32_0 : i32, i32
  }
  func.func @transform_2(%arg0: i32) -> (i32, i32) {
    %c0_i32 = arith.constant 0 : i32
    %c0_i32_0 = arith.constant 0 : i32
    %c0_i32_1 = arith.constant 0 : i32
    return %c0_i32, %c0_i32_0 : i32, i32
  }
  func.func @transform_3(%arg0: i32) -> (i32, i32) {
    %c0_i32 = arith.constant 0 : i32
    %c0_i32_0 = arith.constant 0 : i32
    return %arg0, %c0_i32 : i32, i32
  }
}

</mosaic_0001>

<llo_original>
// kernel: tpu_custom_call.1
$region0: #{tpu_custom_call.1}
  #allocation0 [shape = 'u32[]', space=smem, size = 0x4, offset = 0x4, fixed_abs, tag = 'smem constant byte address 0x4 - core index']
  #allocation1 [shape = 'u32[144,128]{1,0:T(1,128)}', space=vmem, size = 0x12000, scoped, tag = 'internal scratch']
  %s0 = inlined_call_operand.hbm [shape: bf16[8,128], index: 0, kind: input, shape index: {}]
  %s1 = inlined_call_operand.hbm [shape: bf16[1536,128], index: 1, kind: input, shape index: {}]
  %s2 = inlined_call_operand.hbm [shape: f32[8,384], index: 2, kind: input, shape index: {}]
  %s3 = inlined_call_operand.hbm [shape: f32[8,290], index: 3, kind: output, shape index: {}]
  %s4 = sld [smem:[#allocation0]]
  $region34: #{tpu_custom_call.1} parent=0
    _
  %s6 = ssub.s32 1, %s4
  %s7 = scalar_select 0, %s6, %s4
  $region1: #{tpu_custom_call.1} parent=0
    #allocation2 [shape = 'u8[2048]{0}', space=vmem, size = 0x800, scoped, tag = 'input window, operand 0, single buffered']
    #allocation3 [shape = 's32[1]{0}', space=sflag, size = 0x4, scoped, tag = 'scoped memory for tpu_custom_call.1']
    #allocation4 [shape = 's32[1]{0}', space=sflag, size = 0x4, scoped, tag = 'scoped memory for tpu_custom_call.1']
    #allocation5 [shape = 'u8[393216]{0}', space=vmem, size = 0x60000, scoped, tag = 'input window, operand 1, single buffered']
    #allocation6 [shape = 's32[1]{0}', space=sflag, size = 0x4, scoped, tag = 'scoped memory for tpu_custom_call.1']
    #allocation7 [shape = 'u8[12288]{0}', space=vmem, size = 0x3000, scoped, tag = 'input window, operand 2, single buffered']
    #allocation8 [shape = 'u8[12288]{0}', space=vmem, size = 0x3000, scoped, tag = 'output window, operand 0, single buffered']
    %8 = vsyncpa [#allocation3], 0
    %9 = vsyncpa [#allocation6], 0
    %10 = vsyncpa [#allocation4], 0
    // Predicated region
    $region2: #{tpu_custom_call.1} parent=1 // pred_check
      _
    $region3: #{tpu_custom_call.1} parent=1 // pred_check_branch
      %12 = sbr.rel (0) target = $region5
    $region4: #{tpu_custom_call.1} parent=1 // pred_region
      %s14 = ssub.s32 64, 64
      %15 = vsyncadd [#allocation3], %s14
      %s17 = sshll.u32 [#allocation2], 4
      %s18 = int_to_ptr.vmem [resolvable:$true] %s17
      %20 = dma.hbm_to_vmem [thread:$0]  %s0, 64, %s18, [#allocation3]
    $region5: #{tpu_custom_call.1} parent=1 // pred_fallthru
      _
    // Predicated region
    $region6: #{tpu_custom_call.1} parent=1 // pred_check
      _
    $region7: #{tpu_custom_call.1} parent=1 // pred_check_branch
      %22 = sbr.rel (0) target = $region9
    $region8: #{tpu_custom_call.1} parent=1 // pred_region
      %s24 = ssub.s32 12288, 12288
      %25 = vsyncadd [#allocation6], %s24
      %s26 = sshll.u32 [#allocation5], 4
      %s27 = int_to_ptr.vmem [resolvable:$true] %s26
      %32 = dma.hbm_to_vmem [thread:$0]  %s1, 12288, %s27, [#allocation6], 64, 64, 4
    $region9: #{tpu_custom_call.1} parent=1 // pred_fallthru
      _
    // Predicated region
    $region10: #{tpu_custom_call.1} parent=1 // pred_check
      _
    $region11: #{tpu_custom_call.1} parent=1 // pred_check_branch
      %34 = sbr.rel (0) target = $region13
    $region12: #{tpu_custom_call.1} parent=1 // pred_region
      %s36 = ssub.s32 384, 384
      %37 = vsyncadd [#allocation6], %s36
      %s39 = sshll.u32 [#allocation7], 4
      %s40 = int_to_ptr.vmem [resolvable:$true] %s39
      %42 = dma.hbm_to_vmem [thread:$0]  %s2, 384, %s40, [#allocation6]
    $region13: #{tpu_custom_call.1} parent=1 // pred_fallthru
      _
    // Predicated region
    $region14: #{tpu_custom_call.1} parent=1 // pred_check
      _
    $region15: #{tpu_custom_call.1} parent=1 // pred_check_branch
      %44 = sbr.rel (0) target = $region17
    $region16: #{tpu_custom_call.1} parent=1 // pred_region
      %45 = dma.done [#allocation3], 64
    $region17: #{tpu_custom_call.1} parent=1 // pred_fallthru
      _
    // Predicated region
    $region18: #{tpu_custom_call.1} parent=1 // pred_check
      _
    $region19: #{tpu_custom_call.1} parent=1 // pred_check_branch
      %47 = sbr.rel (0) target = $region21
    $region20: #{tpu_custom_call.1} parent=1 // pred_region
      %48 = dma.done [#allocation6], 12288
    $region21: #{tpu_custom_call.1} parent=1 // pred_fallthru
      _
    // Predicated region
    $region22: #{tpu_custom_call.1} parent=1 // pred_check
      _
    $region23: #{tpu_custom_call.1} parent=1 // pred_check_branch
      %50 = sbr.rel (0) target = $region25
    $region24: #{tpu_custom_call.1} parent=1 // pred_region
      %51 = dma.done [#allocation6], 384
    $region25: #{tpu_custom_call.1} parent=1 // pred_fallthru
      _
    %v53 = vld [vmem:[#allocation2] sm:$0xf]
    %v54 = vld [vmem:[#allocation5] sm:$0xf]
    %v55 = vld [vmem:[#allocation5 + $0x4] sm:$0xf]
    %v56 = vld [vmem:[#allocation5 + $0x8] sm:$0xf]
    %v57 = vld [vmem:[#allocation5 + $0xc] sm:$0xf]
    %v58 = vld [vmem:[#allocation5 + $0x10] sm:$0xf]
    %v59 = vld [vmem:[#allocation5 + $0x14] sm:$0xf]
    %v60 = vld [vmem:[#allocation5 + $0x18] sm:$0xf]
    %v61 = vld [vmem:[#allocation5 + $0x1c] sm:$0xf]
    %v62 = vld [vmem:[#allocation5 + $0x20] sm:$0xf]
    %v63 = vld [vmem:[#allocation5 + $0x24] sm:$0xf]
    %v64 = vld [vmem:[#allocation5 + $0x28] sm:$0xf]
    %v65 = vld [vmem:[#allocation5 + $0x2c] sm:$0xf]
    %v66 = vld [vmem:[#allocation5 + $0x30] sm:$0xf]
    %v67 = vld [vmem:[#allocation5 + $0x34] sm:$0xf]
    %v68 = vld [vmem:[#allocation5 + $0x38] sm:$0xf]
    %v69 = vld [vmem:[#allocation5 + $0x3c] sm:$0xf]
    %v70 = vld [vmem:[#allocation7] ss:$0 sm:$0xff]
    %v87 = vunpack.c.l.b16 %v54
    %v88 = vunpack.c.l.b16 %v55
    %v89 = vunpack.c.l.b16 %v56
    %v90 = vunpack.c.l.b16 %v57
    %v91 = vunpack.c.l.b16 %v58
    %v92 = vunpack.c.l.b16 %v59
    %v93 = vunpack.c.l.b16 %v60
    %v94 = vunpack.c.l.b16 %v61
    %v95 = vunpack.c.l.b16 %v62
    %v96 = vunpack.c.l.b16 %v63
    %v97 = vunpack.c.l.b16 %v64
    %v98 = vunpack.c.l.b16 %v65
    %v99 = vunpack.c.l.b16 %v66
    %v100 = vunpack.c.l.b16 %v67
    %v101 = vunpack.c.l.b16 %v68
    %v102 = vunpack.c.l.b16 %v69
    %v103 = vpack.c.b16 %v88, %v87
    %v104 = vpack.c.b16 %v90, %v89
    %v105 = vpack.c.b16 %v92, %v91
    %v106 = vpack.c.b16 %v94, %v93
    %v107 = vpack.c.b16 %v96, %v95
    %v108 = vpack.c.b16 %v98, %v97
    %v109 = vpack.c.b16 %v100, %v99
    %v110 = vpack.c.b16 %v102, %v101
    %119 = vmatprep.subr.bf16.mxu0 0
    %120 = vmatpush1.bf16.msra.mxu0 %v103
    %121 = vmatprep.subr.bf16.mxu0 0
    %122 = vmatpush1.bf16.msra.mxu0 %v104
    %123 = vmatprep.subr.bf16.mxu0 0
    %124 = vmatpush1.bf16.msra.mxu0 %v105
    %125 = vmatprep.subr.bf16.mxu0 0
    %126 = vmatpush1.bf16.msra.mxu0 %v106
    %127 = vmatprep.subr.bf16.mxu0 0
    %128 = vmatpush1.bf16.msra.mxu0 %v107
    %129 = vmatprep.subr.bf16.mxu0 0
    %130 = vmatpush1.bf16.msra.mxu0 %v108
    %131 = vmatprep.subr.bf16.mxu0 0
    %132 = vmatpush1.bf16.msra.mxu0 %v109
    %133 = vmatprep.subr.bf16.mxu0 0
    %134 = vmatpush1.bf16.msra.mxu0 %v110
    %135 = vmatprep.subr.bf16.mxu0 0
    %136 = vmatpush1.bf16.msra.mxu0 0
    %137 = vmatprep.subr.bf16.mxu0 0
    %138 = vmatpush1.bf16.msra.mxu0 0
    %139 = vmatprep.subr.bf16.mxu0 0
    %140 = vmatpush1.bf16.msra.mxu0 0
    %141 = vmatprep.subr.bf16.mxu0 0
    %142 = vmatpush1.bf16.msra.mxu0 0
    %143 = vmatprep.subr.bf16.mxu0 0
    %144 = vmatpush1.bf16.msra.mxu0 0
    %145 = vmatprep.subr.bf16.mxu0 0
    %146 = vmatpush1.bf16.msra.mxu0 0
    %147 = vmatprep.subr.bf16.mxu0 0
    %148 = vmatpush1.bf16.msra.mxu0 0
    %149 = vmatprep.subr.bf16.mxu0 0
    %150 = vmatpush1.bf16.msra.mxu0 0
    %151 = vmatprep.mubr.bf16.mxu0 0
    %152 = vmatmul.mubr.bf16.gmra.mrb[0].mxu0 %v53
    %v153 = vpop.f32.mrb[0].mxu0
    %v154 = vadd.f32 %v70, %v153
    %v155 = vpop.f32.mrb[0].mxu0
    %v156 = vpop.f32.mrb[0].mxu0
    %v157 = vpop.f32.mrb[0].mxu0
    %158 = vdwg.mxu0
    %vm159 = vcmp.gt.f32.partialorder %v154, 0.0
    %v160 = vmul.f32 %v154, 0.2
    %v161 = vsel %vm159, %v154, %v160
    %v162 = vpack.c.bf16 %v161, %v161
    %v163 = vld [vmem:[#allocation5 + $0x40] sm:$0xf]
    %v164 = vld [vmem:[#allocation5 + $0x44] sm:$0xf]
    %v165 = vld [vmem:[#allocation5 + $0x48] sm:$0xf]
    %v166 = vld [vmem:[#allocation5 + $0x4c] sm:$0xf]
    %v167 = vld [vmem:[#allocation5 + $0x50] sm:$0xf]
    %v168 = vld [vmem:[#allocation5 + $0x54] sm:$0xf]
    %v169 = vld [vmem:[#allocation5 + $0x58] sm:$0xf]
    %v170 = vld [vmem:[#allocation5 + $0x5c] sm:$0xf]
    %v171 = vld [vmem:[#allocation5 + $0x60] sm:$0xf]
    %v172 = vld [vmem:[#allocation5 + $0x64] sm:$0xf]
    %v173 = vld [vmem:[#allocation5 + $0x68] sm:$0xf]
    %v174 = vld [vmem:[#allocation5 + $0x6c] sm:$0xf]
    %v175 = vld [vmem:[#allocation5 + $0x70] sm:$0xf]
    %v176 = vld [vmem:[#allocation5 + $0x74] sm:$0xf]
    %v177 = vld [vmem:[#allocation5 + $0x78] sm:$0xf]
    %v178 = vld [vmem:[#allocation5 + $0x7c] sm:$0xf]
    %v179 = vld [vmem:[#allocation7 + $0x1] ss:$0 sm:$0xff]
    %v196 = vunpack.c.l.b16 %v163
    %v197 = vunpack.c.l.b16 %v164
    %v198 = vunpack.c.l.b16 %v165
    %v199 = vunpack.c.l.b16 %v166
    %v200 = vunpack.c.l.b16 %v167
    %v201 = vunpack.c.l.b16 %v168
    %v202 = vunpack.c.l.b16 %v169
    %v203 = vunpack.c.l.b16 %v170
    %v204 = vunpack.c.l.b16 %v171
    %v205 = vunpack.c.l.b16 %v172
    %v206 = vunpack.c.l.b16 %v173
    %v207 = vunpack.c.l.b16 %v174
    %v208 = vunpack.c.l.b16 %v175
    %v209 = vunpack.c.l.b16 %v176
    %v210 = vunpack.c.l.b16 %v177
    %v211 = vunpack.c.l.b16 %v178
    %v212 = vpack.c.b16 %v197, %v196
    %v213 = vpack.c.b16 %v199, %v198
    %v214 = vpack.c.b16 %v201, %v200
    %v215 = vpack.c.b16 %v203, %v202
    %v216 = vpack.c.b16 %v205, %v204
    %v217 = vpack.c.b16 %v207, %v206
    %v218 = vpack.c.b16 %v209, %v208
    %v219 = vpack.c.b16 %v211, %v210
    %228 = vmatprep.subr.bf16.mxu0 0
    %229 = vmatpush1.bf16.msra.mxu0 %v212
    %230 = vmatprep.subr.bf16.mxu0 0
    %231 = vmatpush1.bf16.msra.mxu0 %v213
    %232 = vmatprep.subr.bf16.mxu0 0
    %233 = vmatpush1.bf16.msra.mxu0 %v214
    %234 = vmatprep.subr.bf16.mxu0 0
    %235 = vmatpush1.bf16.msra.mxu0 %v215
    %236 = vmatprep.subr.bf16.mxu0 0
    %237 = vmatpush1.bf16.msra.mxu0 %v216
    %238 = vmatprep.subr.bf16.mxu0 0
    %239 = vmatpush1.bf16.msra.mxu0 %v217
    %240 = vmatprep.subr.bf16.mxu0 0
    %241 = vmatpush1.bf16.msra.mxu0 %v218
    %242 = vmatprep.subr.bf16.mxu0 0
    %243 = vmatpush1.bf16.msra.mxu0 %v219
    %244 = vmatprep.subr.bf16.mxu0 0
    %245 = vmatpush1.bf16.msra.mxu0 0
    %246 = vmatprep.subr.bf16.mxu0 0
    %247 = vmatpush1.bf16.msra.mxu0 0
    %248 = vmatprep.subr.bf16.mxu0 0
    %249 = vmatpush1.bf16.msra.mxu0 0
    %250 = vmatprep.subr.bf16.mxu0 0
    %251 = vmatpush1.bf16.msra.mxu0 0
    %252 = vmatprep.subr.bf16.mxu0 0
    %253 = vmatpush1.bf16.msra.mxu0 0
    %254 = vmatprep.subr.bf16.mxu0 0
    %255 = vmatpush1.bf16.msra.mxu0 0
    %256 = vmatprep.subr.bf16.mxu0 0
    %257 = vmatpush1.bf16.msra.mxu0 0
    %258 = vmatprep.subr.bf16.mxu0 0
    %259 = vmatpush1.bf16.msra.mxu0 0
    %260 = vmatprep.mubr.bf16.mxu0 0
    %261 = vmatmul.mubr.bf16.gmra.mrb[0].mxu0 %v162
    %v262 = vpop.f32.mrb[0].mxu0
    %v263 = vadd.f32 %v179, %v262
    %v264 = vpop.f32.mrb[0].mxu0
    %v265 = vpop.f32.mrb[0].mxu0
    %v266 = vpop.f32.mrb[0].mxu0
    %267 = vdwg.mxu0
    %vm268 = vcmp.gt.f32.partialorder %v263, 0.0
    %v269 = vmul.f32 %v263, 0.2
    %v270 = vsel %vm268, %v263, %v269
    %v271 = vpack.c.bf16 %v270, %v270
    %v272 = vld [vmem:[#allocation5 + $0x80] sm:$0xf]
    %v273 = vld [vmem:[#allocation5 + $0x84] sm:$0xf]
    %v274 = vld [vmem:[#allocation5 + $0x88] sm:$0xf]
    %v275 = vld [vmem:[#allocation5 + $0x8c] sm:$0xf]
    %v276 = vld [vmem:[#allocation5 + $0x90] sm:$0xf]
    %v277 = vld [vmem:[#allocation5 + $0x94] sm:$0xf]
    %v278 = vld [vmem:[#allocation5 + $0x98] sm:$0xf]
    %v279 = vld [vmem:[#allocation5 + $0x9c] sm:$0xf]
    %v280 = vld [vmem:[#allocation5 + $0xa0] sm:$0xf]
    %v281 = vld [vmem:[#allocation5 + $0xa4] sm:$0xf]
    %v282 = vld [vmem:[#allocation5 + $0xa8] sm:$0xf]
    %v283 = vld [vmem:[#allocation5 + $0xac] sm:$0xf]
    %v284 = vld [vmem:[#allocation5 + $0xb0] sm:$0xf]
    %v285 = vld [vmem:[#allocation5 + $0xb4] sm:$0xf]
    %v286 = vld [vmem:[#allocation5 + $0xb8] sm:$0xf]
    %v287 = vld [vmem:[#allocation5 + $0xbc] sm:$0xf]
    %v288 = vld [vmem:[#allocation7 + $0x2] ss:$0 sm:$0xff]
    %v305 = vunpack.c.l.b16 %v272
    %v306 = vunpack.c.l.b16 %v273
    %v307 = vunpack.c.l.b16 %v274
    %v308 = vunpack.c.l.b16 %v275
    %v309 = vunpack.c.l.b16 %v276
    %v310 = vunpack.c.l.b16 %v277
    %v311 = vunpack.c.l.b16 %v278
    %v312 = vunpack.c.l.b16 %v279
    %v313 = vunpack.c.l.b16 %v280
    %v314 = vunpack.c.l.b16 %v281
    %v315 = vunpack.c.l.b16 %v282
    %v316 = vunpack.c.l.b16 %v283
    %v317 = vunpack.c.l.b16 %v284
    %v318 = vunpack.c.l.b16 %v285
    %v319 = vunpack.c.l.b16 %v286
    %v320 = vunpack.c.l.b16 %v287
    %v321 = vpack.c.b16 %v306, %v305
    %v322 = vpack.c.b16 %v308, %v307
    %v323 = vpack.c.b16 %v310, %v309
    %v324 = vpack.c.b16 %v312, %v311
    %v325 = vpack.c.b16 %v314, %v313
    %v326 = vpack.c.b16 %v316, %v315
    %v327 = vpack.c.b16 %v318, %v317
    %v328 = vpack.c.b16 %v320, %v319
    %337 = vmatprep.subr.bf16.mxu0 0
    %338 = vmatpush1.bf16.msra.mxu0 %v321
    %339 = vmatprep.subr.bf16.mxu0 0
    %340 = vmatpush1.bf16.msra.mxu0 %v322
    %341 = vmatprep.subr.bf16.mxu0 0
    %342 = vmatpush1.bf16.msra.mxu0 %v323
    %343 = vmatprep.subr.bf16.mxu0 0
    %344 = vmatpush1.bf16.msra.mxu0 %v324
    %345 = vmatprep.subr.bf16.mxu0 0
    %346 = vmatpush1.bf16.msra.mxu0 %v325
    %347 = vmatprep.subr.bf16.mxu0 0
    %348 = vmatpush1.bf16.msra.mxu0 %v326
    %349 = vmatprep.subr.bf16.mxu0 0
    %350 = vmatpush1.bf16.msra.mxu0 %v327
    %351 = vmatprep.subr.bf16.mxu0 0
    %352 = vmatpush1.bf16.msra.mxu0 %v328
    %353 = vmatprep.subr.bf16.mxu0 0
    %354 = vmatpush1.bf16.msra.mxu0 0
    %355 = vmatprep.subr.bf16.mxu0 0
    %356 = vmatpush1.bf16.msra.mxu0 0
    %357 = vmatprep.subr.bf16.mxu0 0
    %358 = vmatpush1.bf16.msra.mxu0 0
    %359 = vmatprep.subr.bf16.mxu0 0
    %360 = vmatpush1.bf16.msra.mxu0 0
    %361 = vmatprep.subr.bf16.mxu0 0
    %362 = vmatpush1.bf16.msra.mxu0 0
    %363 = vmatprep.subr.bf16.mxu0 0
    %364 = vmatpush1.bf16.msra.mxu0 0
    %365 = vmatprep.subr.bf16.mxu0 0
    %366 = vmatpush1.bf16.msra.mxu0 0
    %367 = vmatprep.subr.bf16.mxu0 0
    %368 = vmatpush1.bf16.msra.mxu0 0
    %369 = vmatprep.mubr.bf16.mxu0 0
    %370 = vmatmul.mubr.bf16.gmra.mrb[0].mxu0 %v271
    %v371 = vpop.f32.mrb[0].mxu0
    %v372 = vadd.f32 %v288, %v371
    %v373 = vpop.f32.mrb[0].mxu0
    %v374 = vpop.f32.mrb[0].mxu0
    %v375 = vpop.f32.mrb[0].mxu0
    %376 = vdwg.mxu0
    %vm377 = vcmp.gt.f32.partialorder %v372, 0.0
    %v378 = vmul.f32 %v372, 0.2
    %v379 = vsel %vm377, %v372, %v378
    %v380 = vpack.c.bf16 %v379, %v379
    %v381 = vld [vmem:[#allocation5 + $0xc0] sm:$0xf]
    %v382 = vld [vmem:[#allocation5 + $0xc4] sm:$0xf]
    %v383 = vld [vmem:[#allocation5 + $0xc8] sm:$0xf]
    %v384 = vld [vmem:[#allocation5 + $0xcc] sm:$0xf]
    %v385 = vld [vmem:[#allocation5 + $0xd0] sm:$0xf]
    %v386 = vld [vmem:[#allocation5 + $0xd4] sm:$0xf]
    %v387 = vld [vmem:[#allocation5 + $0xd8] sm:$0xf]
    %v388 = vld [vmem:[#allocation5 + $0xdc] sm:$0xf]
    %v389 = vld [vmem:[#allocation5 + $0xe0] sm:$0xf]
    %v390 = vld [vmem:[#allocation5 + $0xe4] sm:$0xf]
    %v391 = vld [vmem:[#allocation5 + $0xe8] sm:$0xf]
    %v392 = vld [vmem:[#allocation5 + $0xec] sm:$0xf]
    %v393 = vld [vmem:[#allocation5 + $0xf0] sm:$0xf]
    %v394 = vld [vmem:[#allocation5 + $0xf4] sm:$0xf]
    %v395 = vld [vmem:[#allocation5 + $0xf8] sm:$0xf]
    %v396 = vld [vmem:[#allocation5 + $0xfc] sm:$0xf]
    %v397 = vld [vmem:[#allocation7 + $0x3] ss:$0 sm:$0xff]
    %v414 = vunpack.c.l.b16 %v381
    %v415 = vunpack.c.l.b16 %v382
    %v416 = vunpack.c.l.b16 %v383
    %v417 = vunpack.c.l.b16 %v384
    %v418 = vunpack.c.l.b16 %v385
    %v419 = vunpack.c.l.b16 %v386
    %v420 = vunpack.c.l.b16 %v387
    %v421 = vunpack.c.l.b16 %v388
    %v422 = vunpack.c.l.b16 %v389
    %v423 = vunpack.c.l.b16 %v390
    %v424 = vunpack.c.l.b16 %v391
    %v425 = vunpack.c.l.b16 %v392
    %v426 = vunpack.c.l.b16 %v393
    %v427 = vunpack.c.l.b16 %v394
    %v428 = vunpack.c.l.b16 %v395
    %v429 = vunpack.c.l.b16 %v396
    %v430 = vpack.c.b16 %v415, %v414
    %v431 = vpack.c.b16 %v417, %v416
    %v432 = vpack.c.b16 %v419, %v418
    %v433 = vpack.c.b16 %v421, %v420
    %v434 = vpack.c.b16 %v423, %v422
    %v435 = vpack.c.b16 %v425, %v424
    %v436 = vpack.c.b16 %v427, %v426
    %v437 = vpack.c.b16 %v429, %v428
    %446 = vmatprep.subr.bf16.mxu0 0
    %447 = vmatpush1.bf16.msra.mxu0 %v430
    %448 = vmatprep.subr.bf16.mxu0 0
    %449 = vmatpush1.bf16.msra.mxu0 %v431
    %450 = vmatprep.subr.bf16.mxu0 0
    %451 = vmatpush1.bf16.msra.mxu0 %v432
    %452 = vmatprep.subr.bf16.mxu0 0
    %453 = vmatpush1.bf16.msra.mxu0 %v433
    %454 = vmatprep.subr.bf16.mxu0 0
    %455 = vmatpush1.bf16.msra.mxu0 %v434
    %456 = vmatprep.subr.bf16.mxu0 0
    %457 = vmatpush1.bf16.msra.mxu0 %v435
    %458 = vmatprep.subr.bf16.mxu0 0
    %459 = vmatpush1.bf16.msra.mxu0 %v436
    %460 = vmatprep.subr.bf16.mxu0 0
    %461 = vmatpush1.bf16.msra.mxu0 %v437
    %462 = vmatprep.subr.bf16.mxu0 0
    %463 = vmatpush1.bf16.msra.mxu0 0
    %464 = vmatprep.subr.bf16.mxu0 0
    %465 = vmatpush1.bf16.msra.mxu0 0
    %466 = vmatprep.subr.bf16.mxu0 0
    %467 = vmatpush1.bf16.msra.mxu0 0
    %468 = vmatprep.subr.bf16.mxu0 0
    %469 = vmatpush1.bf16.msra.mxu0 0
    %470 = vmatprep.subr.bf16.mxu0 0
    %471 = vmatpush1.bf16.msra.mxu0 0
    %472 = vmatprep.subr.bf16.mxu0 0
    %473 = vmatpush1.bf16.msra.mxu0 0
    %474 = vmatprep.subr.bf16.mxu0 0
    %475 = vmatpush1.bf16.msra.mxu0 0
    %476 = vmatprep.subr.bf16.mxu0 0
    %477 = vmatpush1.bf16.msra.mxu0 0
    %478 = vmatprep.mubr.bf16.mxu0 0
    %479 = vmatmul.mubr.bf16.gmra.mrb[0].mxu0 %v380
    %v480 = vpop.f32.mrb[0].mxu0
    %v481 = vadd.f32 %v397, %v480
    %v482 = vpop.f32.mrb[0].mxu0
    %v483 = vpop.f32.mrb[0].mxu0
    %v484 = vpop.f32.mrb[0].mxu0
    %485 = vdwg.mxu0
    %vm486 = vcmp.gt.f32.partialorder %v481, 0.0
    %v487 = vmul.f32 %v481, 0.2
    %v488 = vsel %vm486, %v481, %v487
    %v489 = vpack.c.bf16 %v488, %v488
    %v490 = vld [vmem:[#allocation5 + $0x100] sm:$0xf]
    %v491 = vld [vmem:[#allocation5 + $0x104] sm:$0xf]
    %v492 = vld [vmem:[#allocation5 + $0x108] sm:$0xf]
    %v493 = vld [vmem:[#allocation5 + $0x10c] sm:$0xf]
    %v494 = vld [vmem:[#allocation5 + $0x110] sm:$0xf]
    %v495 = vld [vmem:[#allocation5 + $0x114] sm:$0xf]
    %v496 = vld [vmem:[#allocation5 + $0x118] sm:$0xf]
    %v497 = vld [vmem:[#allocation5 + $0x11c] sm:$0xf]
    %v498 = vld [vmem:[#allocation5 + $0x120] sm:$0xf]
    %v499 = vld [vmem:[#allocation5 + $0x124] sm:$0xf]
    %v500 = vld [vmem:[#allocation5 + $0x128] sm:$0xf]
    %v501 = vld [vmem:[#allocation5 + $0x12c] sm:$0xf]
    %v502 = vld [vmem:[#allocation5 + $0x130] sm:$0xf]
    %v503 = vld [vmem:[#allocation5 + $0x134] sm:$0xf]
    %v504 = vld [vmem:[#allocation5 + $0x138] sm:$0xf]
    %v505 = vld [vmem:[#allocation5 + $0x13c] sm:$0xf]
    %v522 = vunpack.c.l.b16 %v490
    %v523 = vunpack.c.l.b16 %v491
    %v524 = vunpack.c.l.b16 %v492
    %v525 = vunpack.c.l.b16 %v493
    %v526 = vunpack.c.l.b16 %v494
    %v527 = vunpack.c.l.b16 %v495
    %v528 = vunpack.c.l.b16 %v496
    %v529 = vunpack.c.l.b16 %v497
    %v530 = vunpack.c.l.b16 %v498
    %v531 = vunpack.c.l.b16 %v499
    %v532 = vunpack.c.l.b16 %v500
    %v533 = vunpack.c.l.b16 %v501
    %v534 = vunpack.c.l.b16 %v502
    %v535 = vunpack.c.l.b16 %v503
    %v536 = vunpack.c.l.b16 %v504
    %v537 = vunpack.c.l.b16 %v505
    %v538 = vpack.c.b16 %v523, %v522
    %v539 = vpack.c.b16 %v525, %v524
    %v540 = vpack.c.b16 %v527, %v526
    %v541 = vpack.c.b16 %v529, %v528
    %v542 = vpack.c.b16 %v531, %v530
    %v543 = vpack.c.b16 %v533, %v532
    %v544 = vpack.c.b16 %v535, %v534
    %v545 = vpack.c.b16 %v537, %v536
    %554 = vmatprep.subr.bf16.mxu0 0
    %555 = vmatpush1.bf16.msra.mxu0 %v538
    %556 = vmatprep.subr.bf16.mxu0 0
    %557 = vmatpush1.bf16.msra.mxu0 %v539
    %558 = vmatprep.subr.bf16.mxu0 0
    %559 = vmatpush1.bf16.msra.mxu0 %v540
    %560 = vmatprep.subr.bf16.mxu0 0
    %561 = vmatpush1.bf16.msra.mxu0 %v541
    %562 = vmatprep.subr.bf16.mxu0 0
    %563 = vmatpush1.bf16.msra.mxu0 %v542
    %564 = vmatprep.subr.bf16.mxu0 0
    %565 = vmatpush1.bf16.msra.mxu0 %v543
    %566 = vmatprep.subr.bf16.mxu0 0
    %567 = vmatpush1.bf16.msra.mxu0 %v544
    %568 = vmatprep.subr.bf16.mxu0 0
    %569 = vmatpush1.bf16.msra.mxu0 %v545
    %570 = vmatprep.subr.bf16.mxu0 0
    %571 = vmatpush1.bf16.msra.mxu0 0
    %572 = vmatprep.subr.bf16.mxu0 0
    %573 = vmatpush1.bf16.msra.mxu0 0
    %574 = vmatprep.subr.bf16.mxu0 0
    %575 = vmatpush1.bf16.msra.mxu0 0
    %576 = vmatprep.subr.bf16.mxu0 0
    %577 = vmatpush1.bf16.msra.mxu0 0
    %578 = vmatprep.subr.bf16.mxu0 0
    %579 = vmatpush1.bf16.msra.mxu0 0
    %580 = vmatprep.subr.bf16.mxu0 0
    %581 = vmatpush1.bf16.msra.mxu0 0
    %582 = vmatprep.subr.bf16.mxu0 0
    %583 = vmatpush1.bf16.msra.mxu0 0
    %584 = vmatprep.subr.bf16.mxu0 0
    %585 = vmatpush1.bf16.msra.mxu0 0
    %586 = vmatprep.mubr.bf16.mxu0 0
    %587 = vmatmul.mubr.bf16.gmra.mrb[0].mxu0 %v489
    %v588 = vpop.f32.mrb[0].mxu0
    %v589 = vadd.f32 0.0, %v588
    %v590 = vpop.f32.mrb[0].mxu0
    %v591 = vpop.f32.mrb[0].mxu0
    %v592 = vpop.f32.mrb[0].mxu0
    %593 = vdwg.mxu0
    %v594 = vld [vmem:[#allocation5 + $0x140] sm:$0xf]
    %v595 = vld [vmem:[#allocation5 + $0x144] sm:$0xf]
    %v596 = vld [vmem:[#allocation5 + $0x148] sm:$0xf]
    %v597 = vld [vmem:[#allocation5 + $0x14c] sm:$0xf]
    %v598 = vld [vmem:[#allocation5 + $0x150] sm:$0xf]
    %v599 = vld [vmem:[#allocation5 + $0x154] sm:$0xf]
    %v600 = vld [vmem:[#allocation5 + $0x158] sm:$0xf]
    %v601 = vld [vmem:[#allocation5 + $0x15c] sm:$0xf]
    %v602 = vld [vmem:[#allocation5 + $0x160] sm:$0xf]
    %v603 = vld [vmem:[#allocation5 + $0x164] sm:$0xf]
    %v604 = vld [vmem:[#allocation5 + $0x168] sm:$0xf]
    %v605 = vld [vmem:[#allocation5 + $0x16c] sm:$0xf]
    %v606 = vld [vmem:[#allocation5 + $0x170] sm:$0xf]
    %v607 = vld [vmem:[#allocation5 + $0x174] sm:$0xf]
    %v608 = vld [vmem:[#allocation5 + $0x178] sm:$0xf]
    %v609 = vld [vmem:[#allocation5 + $0x17c] sm:$0xf]
    %v626 = vunpack.c.l.b16 %v594
    %v627 = vunpack.c.l.b16 %v595
    %v628 = vunpack.c.l.b16 %v596
    %v629 = vunpack.c.l.b16 %v597
    %v630 = vunpack.c.l.b16 %v598
    %v631 = vunpack.c.l.b16 %v599
    %v632 = vunpack.c.l.b16 %v600
    %v633 = vunpack.c.l.b16 %v601
    %v634 = vunpack.c.l.b16 %v602
    %v635 = vunpack.c.l.b16 %v603
    %v636 = vunpack.c.l.b16 %v604
    %v637 = vunpack.c.l.b16 %v605
    %v638 = vunpack.c.l.b16 %v606
    %v639 = vunpack.c.l.b16 %v607
    %v640 = vunpack.c.l.b16 %v608
    %v641 = vunpack.c.l.b16 %v609
    %v642 = vpack.c.b16 %v627, %v626
    %v643 = vpack.c.b16 %v629, %v628
    %v644 = vpack.c.b16 %v631, %v630
    %v645 = vpack.c.b16 %v633, %v632
    %v646 = vpack.c.b16 %v635, %v634
    %v647 = vpack.c.b16 %v637, %v636
    %v648 = vpack.c.b16 %v639, %v638
    %v649 = vpack.c.b16 %v641, %v640
    %658 = vmatprep.subr.bf16.mxu0 0
    %659 = vmatpush1.bf16.msra.mxu0 %v642
    %660 = vmatprep.subr.bf16.mxu0 0
    %661 = vmatpush1.bf16.msra.mxu0 %v643
    %662 = vmatprep.subr.bf16.mxu0 0
    %663 = vmatpush1.bf16.msra.mxu0 %v644
    %664 = vmatprep.subr.bf16.mxu0 0
    %665 = vmatpush1.bf16.msra.mxu0 %v645
    %666 = vmatprep.subr.bf16.mxu0 0
    %667 = vmatpush1.bf16.msra.mxu0 %v646
    %668 = vmatprep.subr.bf16.mxu0 0
    %669 = vmatpush1.bf16.msra.mxu0 %v647
    %670 = vmatprep.subr.bf16.mxu0 0
    %671 = vmatpush1.bf16.msra.mxu0 %v648
    %672 = vmatprep.subr.bf16.mxu0 0
    %673 = vmatpush1.bf16.msra.mxu0 %v649
    %674 = vmatprep.subr.bf16.mxu0 0
    %675 = vmatpush1.bf16.msra.mxu0 0
    %676 = vmatprep.subr.bf16.mxu0 0
    %677 = vmatpush1.bf16.msra.mxu0 0
    %678 = vmatprep.subr.bf16.mxu0 0
    %679 = vmatpush1.bf16.msra.mxu0 0
    %680 = vmatprep.subr.bf16.mxu0 0
    %681 = vmatpush1.bf16.msra.mxu0 0
    %682 = vmatprep.subr.bf16.mxu0 0
    %683 = vmatpush1.bf16.msra.mxu0 0
    %684 = vmatprep.subr.bf16.mxu0 0
    %685 = vmatpush1.bf16.msra.mxu0 0
    %686 = vmatprep.subr.bf16.mxu0 0
    %687 = vmatpush1.bf16.msra.mxu0 0
    %688 = vmatprep.subr.bf16.mxu0 0
    %689 = vmatpush1.bf16.msra.mxu0 0
    %690 = vmatprep.mubr.bf16.mxu0 0
    %691 = vmatmul.mubr.bf16.gmra.mrb[0].mxu0 %v489
    %v692 = vpop.f32.mrb[0].mxu0
    %v693 = vadd.f32 0.0, %v692
    %v694 = vpop.f32.mrb[0].mxu0
    %v695 = vpop.f32.mrb[0].mxu0
    %v696 = vpop.f32.mrb[0].mxu0
    %697 = vdwg.mxu0
    %s698 = scalar_lea.vmem [#allocation7], 4
    %v699 = vld [vmem:[%s698] ss:$8 sm:$0x3]
    %v701 = vlaneseq
    %v702 = vshrl.u32 %v701, 7
    %v703 = vsub.s32 0, %v702
    %v704 = vrot.slane %v699, %v703
    %v705 = vlaneseq
    %v706 = vshrl.u32 %v705, 7
    %v707 = vsub.s32 1, %v706
    %v708 = vrot.slane %v699, %v707
    %v711 = vadd.f32 %v589, %v704
    %v712 = vadd.f32 %v693, %v708
    %vm713 = vcmp.gt.f32.partialorder %v711, 0.0
    %vm714 = vcmp.gt.f32.partialorder %v712, 0.0
    %v715 = vmul.f32 %v711, 0.2
    %v716 = vmul.f32 %v712, 0.2
    %v717 = vsel %vm713, %v711, %v715
    %v718 = vsel %vm714, %v712, %v716
    %v719 = vpack.c.bf16 %v717, %v717
    %v720 = vpack.c.bf16 %v718, %v718
    %v721 = vld [vmem:[#allocation5 + $0x180] sm:$0xf]
    %v722 = vld [vmem:[#allocation5 + $0x184] sm:$0xf]
    %v723 = vld [vmem:[#allocation5 + $0x188] sm:$0xf]
    %v724 = vld [vmem:[#allocation5 + $0x18c] sm:$0xf]
    %v725 = vld [vmem:[#allocation5 + $0x190] sm:$0xf]
    %v726 = vld [vmem:[#allocation5 + $0x194] sm:$0xf]
    %v727 = vld [vmem:[#allocation5 + $0x198] sm:$0xf]
    %v728 = vld [vmem:[#allocation5 + $0x19c] sm:$0xf]
    %v729 = vld [vmem:[#allocation5 + $0x1a0] sm:$0xf]
    %v730 = vld [vmem:[#allocation5 + $0x1a4] sm:$0xf]
    %v731 = vld [vmem:[#allocation5 + $0x1a8] sm:$0xf]
    %v732 = vld [vmem:[#allocation5 + $0x1ac] sm:$0xf]
    %v733 = vld [vmem:[#allocation5 + $0x1b0] sm:$0xf]
    %v734 = vld [vmem:[#allocation5 + $0x1b4] sm:$0xf]
    %v735 = vld [vmem:[#allocation5 + $0x1b8] sm:$0xf]
    %v736 = vld [vmem:[#allocation5 + $0x1bc] sm:$0xf]
    %v737 = vld [vmem:[#allocation5 + $0x1c0] sm:$0xf]
    %v738 = vld [vmem:[#allocation5 + $0x1c4] sm:$0xf]
    %v739 = vld [vmem:[#allocation5 + $0x1c8] sm:$0xf]
    %v740 = vld [vmem:[#allocation5 + $0x1cc] sm:$0xf]
    %v741 = vld [vmem:[#allocation5 + $0x1d0] sm:$0xf]
    %v742 = vld [vmem:[#allocation5 + $0x1d4] sm:$0xf]
    %v743 = vld [vmem:[#allocation5 + $0x1d8] sm:$0xf]
    %v744 = vld [vmem:[#allocation5 + $0x1dc] sm:$0xf]
    %v745 = vld [vmem:[#allocation5 + $0x1e0] sm:$0xf]
    %v746 = vld [vmem:[#allocation5 + $0x1e4] sm:$0xf]
    %v747 = vld [vmem:[#allocation5 + $0x1e8] sm:$0xf]
    %v748 = vld [vmem:[#allocation5 + $0x1ec] sm:$0xf]
    %v749 = vld [vmem:[#allocation5 + $0x1f0] sm:$0xf]
    %v750 = vld [vmem:[#allocation5 + $0x1f4] sm:$0xf]
    %v751 = vld [vmem:[#allocation5 + $0x1f8] sm:$0xf]
    %v752 = vld [vmem:[#allocation5 + $0x1fc] sm:$0xf]
    %v785 = vunpack.c.l.b16 %v721
    %v786 = vunpack.c.l.b16 %v722
    %v787 = vunpack.c.l.b16 %v723
    %v788 = vunpack.c.l.b16 %v724
    %v789 = vunpack.c.l.b16 %v725
    %v790 = vunpack.c.l.b16 %v726
    %v791 = vunpack.c.l.b16 %v727
    %v792 = vunpack.c.l.b16 %v728
    %v793 = vunpack.c.l.b16 %v729
    %v794 = vunpack.c.l.b16 %v730
    %v795 = vunpack.c.l.b16 %v731
    %v796 = vunpack.c.l.b16 %v732
    %v797 = vunpack.c.l.b16 %v733
    %v798 = vunpack.c.l.b16 %v734
    %v799 = vunpack.c.l.b16 %v735
    %v800 = vunpack.c.l.b16 %v736
    %v801 = vunpack.c.l.b16 %v737
    %v802 = vunpack.c.l.b16 %v738
    %v803 = vunpack.c.l.b16 %v739
    %v804 = vunpack.c.l.b16 %v740
    %v805 = vunpack.c.l.b16 %v741
    %v806 = vunpack.c.l.b16 %v742
    %v807 = vunpack.c.l.b16 %v743
    %v808 = vunpack.c.l.b16 %v744
    %v809 = vunpack.c.l.b16 %v745
    %v810 = vunpack.c.l.b16 %v746
    %v811 = vunpack.c.l.b16 %v747
    %v812 = vunpack.c.l.b16 %v748
    %v813 = vunpack.c.l.b16 %v749
    %v814 = vunpack.c.l.b16 %v750
    %v815 = vunpack.c.l.b16 %v751
    %v816 = vunpack.c.l.b16 %v752
    %v817 = vpack.c.b16 %v786, %v785
    %v818 = vpack.c.b16 %v788, %v787
    %v819 = vpack.c.b16 %v790, %v789
    %v820 = vpack.c.b16 %v792, %v791
    %v821 = vpack.c.b16 %v794, %v793
    %v822 = vpack.c.b16 %v796, %v795
    %v823 = vpack.c.b16 %v798, %v797
    %v824 = vpack.c.b16 %v800, %v799
    %v825 = vpack.c.b16 %v802, %v801
    %v826 = vpack.c.b16 %v804, %v803
    %v827 = vpack.c.b16 %v806, %v805
    %v828 = vpack.c.b16 %v808, %v807
    %v829 = vpack.c.b16 %v810, %v809
    %v830 = vpack.c.b16 %v812, %v811
    %v831 = vpack.c.b16 %v814, %v813
    %v832 = vpack.c.b16 %v816, %v815
    %849 = vmatprep.subr.bf16.mxu0 0
    %850 = vmatpush1.bf16.msra.mxu0 %v817
    %851 = vmatprep.subr.bf16.mxu0 0
    %852 = vmatpush1.bf16.msra.mxu0 %v818
    %853 = vmatprep.subr.bf16.mxu0 0
    %854 = vmatpush1.bf16.msra.mxu0 %v819
    %855 = vmatprep.subr.bf16.mxu0 0
    %856 = vmatpush1.bf16.msra.mxu0 %v820
    %857 = vmatprep.subr.bf16.mxu0 0
    %858 = vmatpush1.bf16.msra.mxu0 %v821
    %859 = vmatprep.subr.bf16.mxu0 0
    %860 = vmatpush1.bf16.msra.mxu0 %v822
    %861 = vmatprep.subr.bf16.mxu0 0
    %862 = vmatpush1.bf16.msra.mxu0 %v823
    %863 = vmatprep.subr.bf16.mxu0 0
    %864 = vmatpush1.bf16.msra.mxu0 %v824
    %865 = vmatprep.subr.bf16.mxu0 0
    %866 = vmatpush1.bf16.msra.mxu0 %v825
    %867 = vmatprep.subr.bf16.mxu0 0
    %868 = vmatpush1.bf16.msra.mxu0 %v826
    %869 = vmatprep.subr.bf16.mxu0 0
    %870 = vmatpush1.bf16.msra.mxu0 %v827
    %871 = vmatprep.subr.bf16.mxu0 0
    %872 = vmatpush1.bf16.msra.mxu0 %v828
    %873 = vmatprep.subr.bf16.mxu0 0
    %874 = vmatpush1.bf16.msra.mxu0 %v829
    %875 = vmatprep.subr.bf16.mxu0 0
    %876 = vmatpush1.bf16.msra.mxu0 %v830
    %877 = vmatprep.subr.bf16.mxu0 0
    %878 = vmatpush1.bf16.msra.mxu0 %v831
    %879 = vmatprep.subr.bf16.mxu0 0
    %880 = vmatpush1.bf16.msra.mxu0 %v832
    %881 = vmatprep.mubr.bf16.mxu0 %v720
    %882 = vmatmul.mubr.bf16.gmra.mrb[0].mxu0 %v719
    %v883 = vpop.f32.mrb[0].mxu0
    %v884 = vadd.f32 0.0, %v883
    %v885 = vpop.f32.mrb[0].mxu0
    %v886 = vpop.f32.mrb[0].mxu0
    %v887 = vpop.f32.mrb[0].mxu0
    %888 = vdwg.mxu0
    %v889 = vld [vmem:[#allocation5 + $0x200] sm:$0xf]
    %v890 = vld [vmem:[#allocation5 + $0x204] sm:$0xf]
    %v891 = vld [vmem:[#allocation5 + $0x208] sm:$0xf]
    %v892 = vld [vmem:[#allocation5 + $0x20c] sm:$0xf]
    %v893 = vld [vmem:[#allocation5 + $0x210] sm:$0xf]
    %v894 = vld [vmem:[#allocation5 + $0x214] sm:$0xf]
    %v895 = vld [vmem:[#allocation5 + $0x218] sm:$0xf]
    %v896 = vld [vmem:[#allocation5 + $0x21c] sm:$0xf]
    %v897 = vld [vmem:[#allocation5 + $0x220] sm:$0xf]
    %v898 = vld [vmem:[#allocation5 + $0x224] sm:$0xf]
    %v899 = vld [vmem:[#allocation5 + $0x228] sm:$0xf]
    %v900 = vld [vmem:[#allocation5 + $0x22c] sm:$0xf]
    %v901 = vld [vmem:[#allocation5 + $0x230] sm:$0xf]
    %v902 = vld [vmem:[#allocation5 + $0x234] sm:$0xf]
    %v903 = vld [vmem:[#allocation5 + $0x238] sm:$0xf]
    %v904 = vld [vmem:[#allocation5 + $0x23c] sm:$0xf]
    %v905 = vld [vmem:[#allocation5 + $0x240] sm:$0xf]
    %v906 = vld [vmem:[#allocation5 + $0x244] sm:$0xf]
    %v907 = vld [vmem:[#allocation5 + $0x248] sm:$0xf]
    %v908 = vld [vmem:[#allocation5 + $0x24c] sm:$0xf]
    %v909 = vld [vmem:[#allocation5 + $0x250] sm:$0xf]
    %v910 = vld [vmem:[#allocation5 + $0x254] sm:$0xf]
    %v911 = vld [vmem:[#allocation5 + $0x258] sm:$0xf]
    %v912 = vld [vmem:[#allocation5 + $0x25c] sm:$0xf]
    %v913 = vld [vmem:[#allocation5 + $0x260] sm:$0xf]
    %v914 = vld [vmem:[#allocation5 + $0x264] sm:$0xf]
    %v915 = vld [vmem:[#allocation5 + $0x268] sm:$0xf]
    %v916 = vld [vmem:[#allocation5 + $0x26c] sm:$0xf]
    %v917 = vld [vmem:[#allocation5 + $0x270] sm:$0xf]
    %v918 = vld [vmem:[#allocation5 + $0x274] sm:$0xf]
    %v919 = vld [vmem:[#allocation5 + $0x278] sm:$0xf]
    %v920 = vld [vmem:[#allocation5 + $0x27c] sm:$0xf]
    %v953 = vunpack.c.l.b16 %v889
    %v954 = vunpack.c.l.b16 %v890
    %v955 = vunpack.c.l.b16 %v891
    %v956 = vunpack.c.l.b16 %v892
    %v957 = vunpack.c.l.b16 %v893
    %v958 = vunpack.c.l.b16 %v894
    %v959 = vunpack.c.l.b16 %v895
    %v960 = vunpack.c.l.b16 %v896
    %v961 = vunpack.c.l.b16 %v897
    %v962 = vunpack.c.l.b16 %v898
    %v963 = vunpack.c.l.b16 %v899
    %v964 = vunpack.c.l.b16 %v900
    %v965 = vunpack.c.l.b16 %v901
    %v966 = vunpack.c.l.b16 %v902
    %v967 = vunpack.c.l.b16 %v903
    %v968 = vunpack.c.l.b16 %v904
    %v969 = vunpack.c.l.b16 %v905
    %v970 = vunpack.c.l.b16 %v906
    %v971 = vunpack.c.l.b16 %v907
    %v972 = vunpack.c.l.b16 %v908
    %v973 = vunpack.c.l.b16 %v909
    %v974 = vunpack.c.l.b16 %v910
    %v975 = vunpack.c.l.b16 %v911
    %v976 = vunpack.c.l.b16 %v912
    %v977 = vunpack.c.l.b16 %v913
    %v978 = vunpack.c.l.b16 %v914
    %v979 = vunpack.c.l.b16 %v915
    %v980 = vunpack.c.l.b16 %v916
    %v981 = vunpack.c.l.b16 %v917
    %v982 = vunpack.c.l.b16 %v918
    %v983 = vunpack.c.l.b16 %v919
    %v984 = vunpack.c.l.b16 %v920
    %v985 = vpack.c.b16 %v954, %v953
    %v986 = vpack.c.b16 %v956, %v955
    %v987 = vpack.c.b16 %v958, %v957
    %v988 = vpack.c.b16 %v960, %v959
    %v989 = vpack.c.b16 %v962, %v961
    %v990 = vpack.c.b16 %v964, %v963
    %v991 = vpack.c.b16 %v966, %v965
    %v992 = vpack.c.b16 %v968, %v967
    %v993 = vpack.c.b16 %v970, %v969
    %v994 = vpack.c.b16 %v972, %v971
    %v995 = vpack.c.b16 %v974, %v973
    %v996 = vpack.c.b16 %v976, %v975
    %v997 = vpack.c.b16 %v978, %v977
    %v998 = vpack.c.b16 %v980, %v979
    %v999 = vpack.c.b16 %v982, %v981
    %v1000 = vpack.c.b16 %v984, %v983
    %1017 = vmatprep.subr.bf16.mxu0 0
    %1018 = vmatpush1.bf16.msra.mxu0 %v985
    %1019 = vmatprep.subr.bf16.mxu0 0
    %1020 = vmatpush1.bf16.msra.mxu0 %v986
    %1021 = vmatprep.subr.bf16.mxu0 0
    %1022 = vmatpush1.bf16.msra.mxu0 %v987
    %1023 = vmatprep.subr.bf16.mxu0 0
    %1024 = vmatpush1.bf16.msra.mxu0 %v988
    %1025 = vmatprep.subr.bf16.mxu0 0
    %1026 = vmatpush1.bf16.msra.mxu0 %v989
    %1027 = vmatprep.subr.bf16.mxu0 0
    %1028 = vmatpush1.bf16.msra.mxu0 %v990
    %1029 = vmatprep.subr.bf16.mxu0 0
    %1030 = vmatpush1.bf16.msra.mxu0 %v991
    %1031 = vmatprep.subr.bf16.mxu0 0
    %1032 = vmatpush1.bf16.msra.mxu0 %v992
    %1033 = vmatprep.subr.bf16.mxu0 0
    %1034 = vmatpush1.bf16.msra.mxu0 %v993
    %1035 = vmatprep.subr.bf16.mxu0 0
    %1036 = vmatpush1.bf16.msra.mxu0 %v994
    %1037 = vmatprep.subr.bf16.mxu0 0
    %1038 = vmatpush1.bf16.msra.mxu0 %v995
    %1039 = vmatprep.subr.bf16.mxu0 0
    %1040 = vmatpush1.bf16.msra.mxu0 %v996
    %1041 = vmatprep.subr.bf16.mxu0 0
    %1042 = vmatpush1.bf16.msra.mxu0 %v997
    %1043 = vmatprep.subr.bf16.mxu0 0
    %1044 = vmatpush1.bf16.msra.mxu0 %v998
    %1045 = vmatprep.subr.bf16.mxu0 0
    %1046 = vmatpush1.bf16.msra.mxu0 %v999
    %1047 = vmatprep.subr.bf16.mxu0 0
    %1048 = vmatpush1.bf16.msra.mxu0 %v1000
    %1049 = vmatprep.mubr.bf16.mxu0 %v720
    %1050 = vmatmul.mubr.bf16.gmra.mrb[0].mxu0 %v719
    %v1051 = vpop.f32.mrb[0].mxu0
    %v1052 = vadd.f32 0.0, %v1051
    %v1053 = vpop.f32.mrb[0].mxu0
    %v1054 = vpop.f32.mrb[0].mxu0
    %v1055 = vpop.f32.mrb[0].mxu0
    %1056 = vdwg.mxu0
    %v1057 = vld [vmem:[#allocation5 + $0x280] sm:$0xf]
    %v1058 = vld [vmem:[#allocation5 + $0x284] sm:$0xf]
    %v1059 = vld [vmem:[#allocation5 + $0x288] sm:$0xf]
    %v1060 = vld [vmem:[#allocation5 + $0x28c] sm:$0xf]
    %v1061 = vld [vmem:[#allocation5 + $0x290] sm:$0xf]
    %v1062 = vld [vmem:[#allocation5 + $0x294] sm:$0xf]
    %v1063 = vld [vmem:[#allocation5 + $0x298] sm:$0xf]
    %v1064 = vld [vmem:[#allocation5 + $0x29c] sm:$0xf]
    %v1065 = vld [vmem:[#allocation5 + $0x2a0] sm:$0xf]
    %v1066 = vld [vmem:[#allocation5 + $0x2a4] sm:$0xf]
    %v1067 = vld [vmem:[#allocation5 + $0x2a8] sm:$0xf]
    %v1068 = vld [vmem:[#allocation5 + $0x2ac] sm:$0xf]
    %v1069 = vld [vmem:[#allocation5 + $0x2b0] sm:$0xf]
    %v1070 = vld [vmem:[#allocation5 + $0x2b4] sm:$0xf]
    %v1071 = vld [vmem:[#allocation5 + $0x2b8] sm:$0xf]
    %v1072 = vld [vmem:[#allocation5 + $0x2bc] sm:$0xf]
    %v1073 = vld [vmem:[#allocation5 + $0x2c0] sm:$0xf]
    %v1074 = vld [vmem:[#allocation5 + $0x2c4] sm:$0xf]
    %v1075 = vld [vmem:[#allocation5 + $0x2c8] sm:$0xf]
    %v1076 = vld [vmem:[#allocation5 + $0x2cc] sm:$0xf]
    %v1077 = vld [vmem:[#allocation5 + $0x2d0] sm:$0xf]
    %v1078 = vld [vmem:[#allocation5 + $0x2d4] sm:$0xf]
    %v1079 = vld [vmem:[#allocation5 + $0x2d8] sm:$0xf]
    %v1080 = vld [vmem:[#allocation5 + $0x2dc] sm:$0xf]
    %v1081 = vld [vmem:[#allocation5 + $0x2e0] sm:$0xf]
    %v1082 = vld [vmem:[#allocation5 + $0x2e4] sm:$0xf]
    %v1083 = vld [vmem:[#allocation5 + $0x2e8] sm:$0xf]
    %v1084 = vld [vmem:[#allocation5 + $0x2ec] sm:$0xf]
    %v1085 = vld [vmem:[#allocation5 + $0x2f0] sm:$0xf]
    %v1086 = vld [vmem:[#allocation5 + $0x2f4] sm:$0xf]
    %v1087 = vld [vmem:[#allocation5 + $0x2f8] sm:$0xf]
    %v1088 = vld [vmem:[#allocation5 + $0x2fc] sm:$0xf]
    %v1121 = vunpack.c.l.b16 %v1057
    %v1122 = vunpack.c.l.b16 %v1058
    %v1123 = vunpack.c.l.b16 %v1059
    %v1124 = vunpack.c.l.b16 %v1060
    %v1125 = vunpack.c.l.b16 %v1061
    %v1126 = vunpack.c.l.b16 %v1062
    %v1127 = vunpack.c.l.b16 %v1063
    %v1128 = vunpack.c.l.b16 %v1064
    %v1129 = vunpack.c.l.b16 %v1065
    %v1130 = vunpack.c.l.b16 %v1066
    %v1131 = vunpack.c.l.b16 %v1067
    %v1132 = vunpack.c.l.b16 %v1068
    %v1133 = vunpack.c.l.b16 %v1069
    %v1134 = vunpack.c.l.b16 %v1070
    %v1135 = vunpack.c.l.b16 %v1071
    %v1136 = vunpack.c.l.b16 %v1072
    %v1137 = vunpack.c.l.b16 %v1073
    %v1138 = vunpack.c.l.b16 %v1074
    %v1139 = vunpack.c.l.b16 %v1075
    %v1140 = vunpack.c.l.b16 %v1076
    %v1141 = vunpack.c.l.b16 %v1077
    %v1142 = vunpack.c.l.b16 %v1078
    %v1143 = vunpack.c.l.b16 %v1079
    %v1144 = vunpack.c.l.b16 %v1080
    %v1145 = vunpack.c.l.b16 %v1081
    %v1146 = vunpack.c.l.b16 %v1082
    %v1147 = vunpack.c.l.b16 %v1083
    %v1148 = vunpack.c.l.b16 %v1084
    %v1149 = vunpack.c.l.b16 %v1085
    %v1150 = vunpack.c.l.b16 %v1086
    %v1151 = vunpack.c.l.b16 %v1087
    %v1152 = vunpack.c.l.b16 %v1088
    %v1153 = vpack.c.b16 %v1122, %v1121
    %v1154 = vpack.c.b16 %v1124, %v1123
    %v1155 = vpack.c.b16 %v1126, %v1125
    %v1156 = vpack.c.b16 %v1128, %v1127
    %v1157 = vpack.c.b16 %v1130, %v1129
    %v1158 = vpack.c.b16 %v1132, %v1131
    %v1159 = vpack.c.b16 %v1134, %v1133
    %v1160 = vpack.c.b16 %v1136, %v1135
    %v1161 = vpack.c.b16 %v1138, %v1137
    %v1162 = vpack.c.b16 %v1140, %v1139
    %v1163 = vpack.c.b16 %v1142, %v1141
    %v1164 = vpack.c.b16 %v1144, %v1143
    %v1165 = vpack.c.b16 %v1146, %v1145
    %v1166 = vpack.c.b16 %v1148, %v1147
    %v1167 = vpack.c.b16 %v1150, %v1149
    %v1168 = vpack.c.b16 %v1152, %v1151
    %1185 = vmatprep.subr.bf16.mxu0 0
    %1186 = vmatpush1.bf16.msra.mxu0 %v1153
    %1187 = vmatprep.subr.bf16.mxu0 0
    %1188 = vmatpush1.bf16.msra.mxu0 %v1154
    %1189 = vmatprep.subr.bf16.mxu0 0
    %1190 = vmatpush1.bf16.msra.mxu0 %v1155
    %1191 = vmatprep.subr.bf16.mxu0 0
    %1192 = vmatpush1.bf16.msra.mxu0 %v1156
    %1193 = vmatprep.subr.bf16.mxu0 0
    %1194 = vmatpush1.bf16.msra.mxu0 %v1157
    %1195 = vmatprep.subr.bf16.mxu0 0
    %1196 = vmatpush1.bf16.msra.mxu0 %v1158
    %1197 = vmatprep.subr.bf16.mxu0 0
    %1198 = vmatpush1.bf16.msra.mxu0 %v1159
    %1199 = vmatprep.subr.bf16.mxu0 0
    %1200 = vmatpush1.bf16.msra.mxu0 %v1160
    %1201 = vmatprep.subr.bf16.mxu0 0
    %1202 = vmatpush1.bf16.msra.mxu0 %v1161
    %1203 = vmatprep.subr.bf16.mxu0 0
    %1204 = vmatpush1.bf16.msra.mxu0 %v1162
    %1205 = vmatprep.subr.bf16.mxu0 0
    %1206 = vmatpush1.bf16.msra.mxu0 %v1163
    %1207 = vmatprep.subr.bf16.mxu0 0
    %1208 = vmatpush1.bf16.msra.mxu0 %v1164
    %1209 = vmatprep.subr.bf16.mxu0 0
    %1210 = vmatpush1.bf16.msra.mxu0 %v1165
    %1211 = vmatprep.subr.bf16.mxu0 0
    %1212 = vmatpush1.bf16.msra.mxu0 %v1166
    %1213 = vmatprep.subr.bf16.mxu0 0
    %1214 = vmatpush1.bf16.msra.mxu0 %v1167
    %1215 = vmatprep.subr.bf16.mxu0 0
    %1216 = vmatpush1.bf16.msra.mxu0 %v1168
    %1217 = vmatprep.mubr.bf16.mxu0 %v720
    %1218 = vmatmul.mubr.bf16.gmra.mrb[0].mxu0 %v719
    %v1219 = vpop.f32.mrb[0].mxu0
    %v1220 = vadd.f32 0.0, %v1219
    %v1221 = vpop.f32.mrb[0].mxu0
    %v1222 = vpop.f32.mrb[0].mxu0
    %v1223 = vpop.f32.mrb[0].mxu0
    %1224 = vdwg.mxu0
    %s1225 = scalar_lea.vmem [#allocation7], 5
    %v1226 = vld [vmem:[%s1225] ss:$8 sm:$0x7]
    %v1228 = vlaneseq
    %v1229 = vshrl.u32 %v1228, 7
    %v1230 = vsub.s32 0, %v1229
    %v1231 = vrot.slane %v1226, %v1230
    %v1232 = vlaneseq
    %v1233 = vshrl.u32 %v1232, 7
    %v1234 = vsub.s32 1, %v1233
    %v1235 = vrot.slane %v1226, %v1234
    %v1236 = vlaneseq
    %v1237 = vshrl.u32 %v1236, 7
    %v1238 = vsub.s32 2, %v1237
    %v1239 = vrot.slane %v1226, %v1238
    %v1243 = vadd.f32 %v884, %v1231
    %v1244 = vadd.f32 %v1052, %v1235
    %v1245 = vadd.f32 %v1220, %v1239
    %vm1246 = vcmp.gt.f32.partialorder %v1243, 0.0
    %vm1247 = vcmp.gt.f32.partialorder %v1244, 0.0
    %vm1248 = vcmp.gt.f32.partialorder %v1245, 0.0
    %v1249 = vmul.f32 %v1243, 0.2
    %v1250 = vmul.f32 %v1244, 0.2
    %v1251 = vmul.f32 %v1245, 0.2
    %v1252 = vsel %vm1246, %v1243, %v1249
    %v1253 = vsel %vm1247, %v1244, %v1250
    %v1254 = vsel %vm1248, %v1245, %v1251
    %1255 = vst [vmem:[#allocation8] sm:$0xff] %v1252
    %1256 = vst [vmem:[#allocation8 + $0x8] sm:$0xff] %v1253
    %vm1257 = vcmask 277504
    %1258 = vst.msk [vmem:[#allocation8 + $0x10] sm:$0xff] %vm1257, %v1254
    // Predicated region
    $region26: #{tpu_custom_call.1} parent=1 // pred_check
      _
    $region27: #{tpu_custom_call.1} parent=1 // pred_check_branch
      %1260 = sbr.rel (0) target = $region29
    $region28: #{tpu_custom_call.1} parent=1 // pred_region
      %s1262 = ssub.s32 384, 384
      %1263 = vsyncadd [#allocation4], %s1262
      %s1265 = sshll.u32 [#allocation8], 4
      %s1266 = int_to_ptr.vmem [resolvable:$true] %s1265
      %1268 = dma.vmem_to_hbm [thread:$0]  %s1266, 384, %s3, [#allocation4]
    $region29: #{tpu_custom_call.1} parent=1 // pred_fallthru
      _
    // Predicated region
    $region30: #{tpu_custom_call.1} parent=1 // pred_check
      _
    $region31: #{tpu_custom_call.1} parent=1 // pred_check_branch
      %1270 = sbr.rel (0) target = $region33
    $region32: #{tpu_custom_call.1} parent=1 // pred_region
      %1271 = dma.done [#allocation4], 384
    $region33: #{tpu_custom_call.1} parent=1 // pred_fallthru
      _
    %1272 = vsyncpa [#allocation3], 1
    %1273 = vsyncpa [#allocation6], 1
    %1274 = vsyncpa [#allocation4], 1

</llo_original>
